<compile_context>
chip_gen: v5e
topology: v5e:2x2
jax: 0.10.0
libtpu: 0.0.40
codegen_flags: <defaults>
</compile_context>

<pallas_src>
import jax
import jax.numpy as jnp
from jax.experimental import pallas as pl
from jax.experimental.pallas import tpu as pltpu

CIN = 16
COUT = 64
EPS = 1e-3


def fused_add_conv_bn_kernel(x1_ref, x2_ref, w_ref, bias_ref, o_ref):
    # x1_ref, x2_ref : (Nb, CIN, t_hw)   NCHW tiles, lane axis = H*W
    # w_ref          : (COUT, CIN)       BN-scale-folded 1x1-conv weight (resident)
    # bias_ref       : (COUT, 1)         folded BN bias (resident)
    # o_ref          : (Nb, COUT, t_hw)  lane-dense output tile (NCHW layout)
    w = w_ref[...]
    b = bias_ref[...]
    nb = x1_ref.shape[0]
    for n in range(nb):                                        # static unroll (Nb small)
        s = x1_ref[n] + x2_ref[n]                              # VPU add, hidden under DMA
        acc = jnp.dot(w, s, preferred_element_type=jnp.float32)  # 1x1 conv == MXU matmul
        o_ref[n] = (acc + b).astype(o_ref.dtype)               # unmasked lane-dense store


def fused_add_conv_bn(x10, x5, weight, gamma, beta, running_mean, running_var,
                      *, t_hw_max=8192):
    """x10, x5: NCHW float32 arrays (N, CIN, H, W). Returns NCHW (N, COUT, H, W)."""
    N, C, H, W = x10.shape
    assert C == CIN
    HW = H * W

    # Pure reshape views -- no transpose, no extra HBM traffic.
    a = x10.reshape(N, CIN, HW)
    b = x5.reshape(N, CIN, HW)

    # Fold inference-mode BatchNorm into the conv weight and a per-channel bias.
    # TODO(synk): PyTorch module defaults to train() mode (batch statistics +
    #             running-stat updates); eval-mode running-stat BN is what is
    #             implemented here.
    scale = gamma / jnp.sqrt(running_var + EPS)                 # (COUT,)
    w_mat = weight.reshape(COUT, CIN).astype(jnp.float32)
    w_scaled = w_mat * scale[:, None]                           # (COUT, CIN)
    bias = (beta - running_mean * scale).reshape(COUT, 1).astype(jnp.float32)

    # ---- Lane-tile selection (no padding: Pallas masks boundary blocks) ----
    if HW <= t_hw_max:
        t_hw = HW                                   # single full-dim lane tile (always legal)
    else:
        n_t = pl.cdiv(HW, t_hw_max)
        t_hw = pl.cdiv(pl.cdiv(HW, n_t), 128) * 128  # even-ish split, multiple of 128
    n_hw_tiles = pl.cdiv(HW, t_hw)

    # Block several batch images per step when HW is small (keeps >=~1 MiB tiles),
    # but keep at least 2 grid steps when possible (v7x has 2 TensorCores).
    Nb = max(1, min(N, t_hw_max // t_hw, 64))
    while Nb > 1 and pl.cdiv(N, Nb) * n_hw_tiles < 2:
        Nb = max(1, Nb // 2)

    grid = (pl.cdiv(N, Nb), n_hw_tiles)

    cost = pl.CostEstimate(
        flops=2 * N * HW * CIN * COUT,
        transcendentals=0,
        bytes_accessed=(2 * N * CIN * HW + N * COUT * HW) * 4
                       + (COUT * CIN + COUT) * 4,
    )

    out_flat = pl.pallas_call(
        fused_add_conv_bn_kernel,
        out_shape=jax.ShapeDtypeStruct((N, COUT, HW), jnp.float32),
        grid_spec=pltpu.PrefetchScalarGridSpec(
            num_scalar_prefetch=0,
            grid=grid,
            in_specs=[
                pl.BlockSpec((Nb, CIN, t_hw), lambda i, j: (i, 0, j)),   # x10 tile
                pl.BlockSpec((Nb, CIN, t_hw), lambda i, j: (i, 0, j)),   # x5 tile
                pl.BlockSpec((COUT, CIN), lambda i, j: (0, 0)),          # folded weight
                pl.BlockSpec((COUT, 1), lambda i, j: (0, 0)),            # folded BN bias
            ],
            out_specs=pl.BlockSpec((Nb, COUT, t_hw), lambda i, j: (i, 0, j)),
        ),
        compiler_params=pltpu.CompilerParams(
            dimension_semantics=("parallel", "parallel"),
            vmem_limit_bytes=32 << 20),
        cost_estimate=cost,
    )(a, b, w_scaled, bias)

    # Still NCHW; no tail slice needed since we never padded.
    return out_flat.reshape(N, COUT, H, W)


def reference(x10, x5, weight, gamma, beta, running_mean, running_var):
    s = x10 + x5                                                # (N, CIN, H, W)
    w_mat = weight.reshape(COUT, CIN)
    conv = jnp.einsum("oc,nchw->nohw", w_mat, s)
    scale = gamma / jnp.sqrt(running_var + EPS)
    bias = beta - running_mean * scale
    return conv * scale[None, :, None, None] + bias[None, :, None, None]


if __name__ == "__main__":
    key = jax.random.PRNGKey(0)
    k1, k2, k3 = jax.random.split(key, 3)

    # Small shapes consistent with the module (Cin=16, Cout=64), reduced spatial.
    N, H, W = 2, 16, 16
    x10 = jax.random.normal(k1, (N, CIN, H, W), dtype=jnp.float32)
    x5 = jax.random.normal(k2, (N, CIN, H, W), dtype=jnp.float32)

    # Deterministic synthetic parameters (not a checkpoint load).
    weight = jax.random.normal(k3, (COUT, CIN, 1, 1), dtype=jnp.float32) * 0.1
    gamma = 0.5 + jnp.arange(COUT, dtype=jnp.float32) / COUT
    beta = 0.01 * jnp.arange(COUT, dtype=jnp.float32)
    running_mean = 0.1 * jnp.sin(jnp.arange(COUT, dtype=jnp.float32))
    running_var = 1.0 + 0.05 * jnp.arange(COUT, dtype=jnp.float32)

    out = fused_add_conv_bn(x10, x5, weight, gamma, beta,
                            running_mean, running_var)
    out = jax.block_until_ready(out)

    ref = reference(x10, x5, weight, gamma, beta, running_mean, running_var)
    assert out.shape == (N, COUT, H, W)
    assert jnp.allclose(out, ref, atol=1e-4, rtol=1e-4), "mismatch vs reference"

    print("KERNEL_OK")
</pallas_src>

<mosaic_0001>
module attributes {stable_mosaic.version = 11 : i64} {
  func.func @fused_add_conv_bn_kernel(%arg0: i32, %arg1: i32, %arg2: memref<1x16x256xf32, #tpu.memory_space<vmem>>, %arg3: memref<1x16x256xf32, #tpu.memory_space<vmem>>, %arg4: memref<64x16xf32, #tpu.memory_space<vmem>>, %arg5: memref<64x1xf32, #tpu.memory_space<vmem>>, %arg6: memref<1x64x256xf32, #tpu.memory_space<vmem>>) attributes {dimension_semantics = [#tpu.dimension_semantics<parallel>, #tpu.dimension_semantics<parallel>], iteration_bounds = array<i64: 2, 1>, scalar_prefetch = 0 : i64, scratch_operands = 0 : i64, tpu.core_type = #tpu.core_type<tc>, window_params = [{transform_indices = @transform_0, window_bounds = array<i64: 1, 16, 256>}, {transform_indices = @transform_1, window_bounds = array<i64: 1, 16, 256>}, {pipeline_mode = #tpu.pipeline_mode<synchronous>, transform_indices = @transform_2, window_bounds = array<i64: 64, 16>}, {pipeline_mode = #tpu.pipeline_mode<synchronous>, transform_indices = @transform_3, window_bounds = array<i64: 64, 1>}, {transform_indices = @transform_4, window_bounds = array<i64: 1, 64, 256>}]} {
    %c0 = arith.constant 0 : index
    %c0_0 = arith.constant 0 : index
    %0 = vector.load %arg4[%c0, %c0_0] : memref<64x16xf32, #tpu.memory_space<vmem>>, vector<64x16xf32>
    %c0_1 = arith.constant 0 : index
    %c0_2 = arith.constant 0 : index
    %1 = vector.load %arg5[%c0_1, %c0_2] : memref<64x1xf32, #tpu.memory_space<vmem>>, vector<64x1xf32>
    %c0_3 = arith.constant 0 : index
    %c0_4 = arith.constant 0 : index
    %c0_5 = arith.constant 0 : index
    %2 = vector.load %arg2[%c0_3, %c0_4, %c0_5] : memref<1x16x256xf32, #tpu.memory_space<vmem>>, vector<1x16x256xf32>
    %3 = vector.shape_cast %2 : vector<1x16x256xf32> to vector<16x256xf32>
    %c0_6 = arith.constant 0 : index
    %c0_7 = arith.constant 0 : index
    %c0_8 = arith.constant 0 : index
    %4 = vector.load %arg3[%c0_6, %c0_7, %c0_8] : memref<1x16x256xf32, #tpu.memory_space<vmem>>, vector<1x16x256xf32>
    %5 = vector.shape_cast %4 : vector<1x16x256xf32> to vector<16x256xf32>
    %6 = arith.addf %3, %5 : vector<16x256xf32>
    %cst = arith.constant dense<0.000000e+00> : vector<64x256xf32>
    %7 = tpu.matmul %0, %6, %cst {dimension_numbers = #tpu.dot_dimension_numbers<[1], [0], [0], [1], [0, 0, 1, 1], [], []>} : vector<64x16xf32>, vector<16x256xf32>, vector<64x256xf32> -> vector<64x256xf32>
    %8 = vector.broadcast %1 : vector<64x1xf32> to vector<64x256xf32>
    %9 = arith.addf %7, %8 : vector<64x256xf32>
    %c0_9 = arith.constant 0 : index
    %c0_10 = arith.constant 0 : index
    %c0_11 = arith.constant 0 : index
    %10 = vector.load %arg6[%c0_9, %c0_10, %c0_11] : memref<1x64x256xf32, #tpu.memory_space<vmem>>, vector<1x64x256xf32>
    %11 = vector.shape_cast %10 : vector<1x64x256xf32> to vector<64x256xf32>
    %12 = vector.shape_cast %9 : vector<64x256xf32> to vector<1x64x256xf32>
    tpu.vector_store %arg6[%c0_9, %c0_10, %c0_11], %12 {strides = array<i32>} : memref<1x64x256xf32, #tpu.memory_space<vmem>>, vector<1x64x256xf32>,
    return
  }
  func.func @transform_0(%arg0: i32, %arg1: i32) -> (i32, i32, i32) {
    %c0_i32 = arith.constant 0 : i32
    %c0_i32_0 = arith.constant 0 : i32
    return %arg0, %c0_i32, %arg1 : i32, i32, i32
  }
  func.func @transform_1(%arg0: i32, %arg1: i32) -> (i32, i32, i32) {
    %c0_i32 = arith.constant 0 : i32
    %c0_i32_0 = arith.constant 0 : i32
    return %arg0, %c0_i32, %arg1 : i32, i32, i32
  }
  func.func @transform_2(%arg0: i32, %arg1: i32) -> (i32, i32) {
    %c0_i32 = arith.constant 0 : i32
    %c0_i32_0 = arith.constant 0 : i32
    %c0_i32_1 = arith.constant 0 : i32
    return %c0_i32, %c0_i32_0 : i32, i32
  }
  func.func @transform_3(%arg0: i32, %arg1: i32) -> (i32, i32) {
    %c0_i32 = arith.constant 0 : i32
    %c0_i32_0 = arith.constant 0 : i32
    %c0_i32_1 = arith.constant 0 : i32
    return %c0_i32, %c0_i32_0 : i32, i32
  }
  func.func @transform_4(%arg0: i32, %arg1: i32) -> (i32, i32, i32) {
    %c0_i32 = arith.constant 0 : i32
    %c0_i32_0 = arith.constant 0 : i32
    return %arg0, %c0_i32, %arg1 : i32, i32, i32
  }
}

</mosaic_0001>

<llo_original>
// kernel: tpu_custom_call.1
$region0: #{tpu_custom_call.1}
  #allocation0 [shape = 'u32[]', space=smem, size = 0x4, offset = 0x4, fixed_abs, tag = 'smem constant byte address 0x4 - core index']
  #allocation1 [shape = 'u32[72,128]{1,0:T(1,128)}', space=vmem, size = 0x9000, scoped, tag = 'internal scratch']
  %s0 = inlined_call_operand.vmem [shape: f32[2,16,256], index: 0, kind: input, shape index: {}]
  %s1 = inlined_call_operand.vmem [shape: f32[2,16,256], index: 1, kind: input, shape index: {}]
  %s2 = inlined_call_operand.vmem [shape: f32[64,16], index: 2, kind: input, shape index: {}]
  %s3 = inlined_call_operand.vmem [shape: f32[64,1], index: 3, kind: input, shape index: {}]
  %s4 = inlined_call_operand.hbm [shape: f32[2,64,256], index: 4, kind: output, shape index: {}]
  %s5 = sld [smem:[#allocation0]]
  $region49: #{tpu_custom_call.1} parent=0
    _
  %s7 = ssub.s32 1, %s5
  %s8 = scalar_select 0, %s7, %s5
  $region1: #{tpu_custom_call.1} parent=0
    #allocation2 [shape = 'u8[131072]{0}', space=vmem, size = 0x20000, scoped, tag = 'output window, operand 0']
    #allocation3 [shape = 's32[2]{0}', space=sflag, size = 0x8, scoped, tag = 'scoped memory for tpu_custom_call.1']
    %9 = vsyncpa [#allocation3], 0
    %s10 = scalar_lea.sflag [#allocation3], 1
    %11 = vsyncpa %s10, 0
    loop: start=0, step=1, limit=4
    $region2: #{tpu_custom_call.1} parent=1 // loop_pre_header
      _
    $region3: #{tpu_custom_call.1} parent=1 // loop_header
      %s13 = sphi 0, %s17
      %p14 = scmp.ge.s32.totalorder %s13, 4
      %s20 = sphi 0, %s32
      %s21 = sphi 0, %s28
      %s22 = sphi 0, %s20
      %s23 = sphi 0, %s21
      %s24 = sphi 0, %s22
      %s25 = sphi 0, %s23
      %s37 = sphi 0, %s39
      %s40 = sphi 0, %s37
      %s41 = sphi 0, %s40
      %s57 = sphi 0, %s41
      %s65 = sphi 0, %s67
      %s68 = sphi 0, %s65
      %s69 = sphi 0, %s68
      %s85 = sphi 0, %s69
      %s89 = sphi 0, %s89
      %s91 = sphi 0, %s89
      %s92 = sphi 0, %s91
      %s106 = sphi 0, %s92
      %s110 = sphi 0, %s110
      %s112 = sphi 0, %s110
      %s113 = sphi 0, %s112
      %s127 = sphi 0, %s113
      %s135 = sphi 0, %s137
      %s138 = sphi 0, %s135
      %s139 = sphi 0, %s138
      %s155 = sphi 0, %s139
    $region4: #{tpu_custom_call.1} parent=1 // loop_header_branch
      %16 = sbr.rel (%p14) target = $region8
    $region5: #{tpu_custom_call.1} parent=1 // loop_body
      %s18 = ssub.s32 %s13, 1
      %s19 = ssub.s32 %s13, 2
      %s26 = sadd.s32 1, %s21
      %p27 = scmp.ge.s32.totalorder %s26, 1
      %s28 = scalar_select %p27, 0, %s26
      %s29 = sadd.s32 1, %s20
      %s30 = scalar_select %p27, %s29, %s20
      %p31 = scmp.ge.s32.totalorder %s30, 2
      %s32 = scalar_select %p31, 0, %s30
      %s33 = ssub.s32 %s20, %s32
      %s34 = ssub.s32 %s21, %s28
      %s35 = sor.u32 %s33, %s34
      %p36 = scmp.eq.s32.totalorder %s35, 0
      %s38 = sadd.s32 %s37, 1
      %s39 = scalar_select %p36, %s37, %s38
      %p42 = pneg %p36
      %p43 = scmp.eq.s32.totalorder %s13, 1
      %p44 = por %p42, %p43
      %p45 = scmp.ne.s32.totalorder %s37, %s40
      %p46 = scmp.eq.s32.totalorder %s13, 0
      %p47 = por %p45, %p46
      %p48 = scmp.ne.s32.totalorder %s37, %s40
      %p49 = scmp.eq.s32.totalorder %s18, 1
      %p50 = por %p48, %p49
      %p51 = scmp.ne.s32.totalorder %s40, %s41
      %p52 = scmp.eq.s32.totalorder %s18, 0
      %p53 = por %p51, %p52
      %p54 = scmp.ne.s32.totalorder %s40, %s41
      %p55 = scmp.eq.s32.totalorder %s19, 1
      %p56 = por %p54, %p55
      %p58 = scmp.ne.s32.totalorder %s41, %s57
      %p59 = scmp.eq.s32.totalorder %s19, 0
      %p60 = por %p58, %p59
      %s61 = ssub.s32 %s20, %s32
      %s62 = ssub.s32 %s21, %s28
      %s63 = sor.u32 %s61, %s62
      %p64 = scmp.eq.s32.totalorder %s63, 0
      %s66 = sadd.s32 %s65, 1
      %s67 = scalar_select %p64, %s65, %s66
      %p70 = pneg %p64
      %p71 = scmp.eq.s32.totalorder %s13, 1
      %p72 = por %p70, %p71
      %p73 = scmp.ne.s32.totalorder %s65, %s68
      %p74 = scmp.eq.s32.totalorder %s13, 0
      %p75 = por %p73, %p74
      %p76 = scmp.ne.s32.totalorder %s65, %s68
      %p77 = scmp.eq.s32.totalorder %s18, 1
      %p78 = por %p76, %p77
      %p79 = scmp.ne.s32.totalorder %s68, %s69
      %p80 = scmp.eq.s32.totalorder %s18, 0
      %p81 = por %p79, %p80
      %p82 = scmp.ne.s32.totalorder %s68, %s69
      %p83 = scmp.eq.s32.totalorder %s19, 1
      %p84 = por %p82, %p83
      %p86 = scmp.ne.s32.totalorder %s69, %s85
      %p87 = scmp.eq.s32.totalorder %s19, 0
      %p88 = por %p86, %p87
      %s90 = sadd.s32 %s89, 1
      %p93 = scmp.eq.s32.totalorder %s13, 1
      %p94 = scmp.ne.s32.totalorder %s89, %s91
      %p95 = scmp.eq.s32.totalorder %s13, 0
      %p96 = por %p94, %p95
      %p97 = scmp.ne.s32.totalorder %s89, %s91
      %p98 = scmp.eq.s32.totalorder %s18, 1
      %p99 = por %p97, %p98
      %p100 = scmp.ne.s32.totalorder %s91, %s92
      %p101 = scmp.eq.s32.totalorder %s18, 0
      %p102 = por %p100, %p101
      %p103 = scmp.ne.s32.totalorder %s91, %s92
      %p104 = scmp.eq.s32.totalorder %s19, 1
      %p105 = por %p103, %p104
      %p107 = scmp.ne.s32.totalorder %s92, %s106
      %p108 = scmp.eq.s32.totalorder %s19, 0
      %p109 = por %p107, %p108
      %s111 = sadd.s32 %s110, 1
      %p114 = scmp.eq.s32.totalorder %s13, 1
      %p115 = scmp.ne.s32.totalorder %s110, %s112
      %p116 = scmp.eq.s32.totalorder %s13, 0
      %p117 = por %p115, %p116
      %p118 = scmp.ne.s32.totalorder %s110, %s112
      %p119 = scmp.eq.s32.totalorder %s18, 1
      %p120 = por %p118, %p119
      %p121 = scmp.ne.s32.totalorder %s112, %s113
      %p122 = scmp.eq.s32.totalorder %s18, 0
      %p123 = por %p121, %p122
      %p124 = scmp.ne.s32.totalorder %s112, %s113
      %p125 = scmp.eq.s32.totalorder %s19, 1
      %p126 = por %p124, %p125
      %p128 = scmp.ne.s32.totalorder %s113, %s127
      %p129 = scmp.eq.s32.totalorder %s19, 0
      %p130 = por %p128, %p129
      %s131 = ssub.s32 %s20, %s32
      %s132 = ssub.s32 %s21, %s28
      %s133 = sor.u32 %s131, %s132
      %p134 = scmp.eq.s32.totalorder %s133, 0
      %s136 = sadd.s32 %s135, 1
      %s137 = scalar_select %p134, %s135, %s136
      %p140 = pneg %p134
      %p141 = scmp.eq.s32.totalorder %s13, 1
      %p142 = por %p140, %p141
      %p143 = scmp.ne.s32.totalorder %s135, %s138
      %p144 = scmp.eq.s32.totalorder %s13, 0
      %p145 = por %p143, %p144
      %p146 = scmp.ne.s32.totalorder %s135, %s138
      %p147 = scmp.eq.s32.totalorder %s18, 1
      %p148 = por %p146, %p147
      %p149 = scmp.ne.s32.totalorder %s138, %s139
      %p150 = scmp.eq.s32.totalorder %s18, 0
      %p151 = por %p149, %p150
      %p152 = scmp.ne.s32.totalorder %s138, %s139
      %p153 = scmp.eq.s32.totalorder %s19, 1
      %p154 = por %p152, %p153
      %p156 = scmp.ne.s32.totalorder %s139, %s155
      %p157 = scmp.eq.s32.totalorder %s19, 0
      %p158 = por %p156, %p157
      %p159 = scmp.le.s32.totalorder 1, %s13
      %p160 = scmp.lt.s32.totalorder %s13, 3
      %p161 = pnand %p159, %p160
      %p162 = pneg %p161
      // Predicated region
      $region9: #{tpu_custom_call.1} parent=5 // pred_check
        _
      $region10: #{tpu_custom_call.1} parent=5 // pred_check_branch
        %164 = sbr.rel (%p161) target = $region12
      $region11: #{tpu_custom_call.1} parent=5 // pred_region
        %s165 = ssub.s32 %s13, 1
        // Predicated region
        $region13: #{tpu_custom_call.1} parent=11 // pred_check
          %p166 = pneg %p102
        $region14: #{tpu_custom_call.1} parent=11 // pred_check_branch
          %168 = sbr.rel (%p166) target = $region16
        $region15: #{tpu_custom_call.1} parent=11 // pred_region
          _
        $region16: #{tpu_custom_call.1} parent=11 // pred_fallthru
          _
        // Predicated region
        $region17: #{tpu_custom_call.1} parent=11 // pred_check
          %p169 = pneg %p123
        $region18: #{tpu_custom_call.1} parent=11 // pred_check_branch
          %171 = sbr.rel (%p169) target = $region20
        $region19: #{tpu_custom_call.1} parent=11 // pred_region
          _
        $region20: #{tpu_custom_call.1} parent=11 // pred_fallthru
          _
      $region12: #{tpu_custom_call.1} parent=5 // pred_fallthru
        _
      %p172 = scmp.lt.s32.totalorder %s13, 2
      // Predicated region
      $region21: #{tpu_custom_call.1} parent=5 // pred_check
        %p173 = pneg %p172
      $region22: #{tpu_custom_call.1} parent=5 // pred_check_branch
        %175 = sbr.rel (%p173) target = $region24
      $region23: #{tpu_custom_call.1} parent=5 // pred_region
        // Predicated region
        $region25: #{tpu_custom_call.1} parent=23 // pred_check
          %p176 = pneg %p47
        $region26: #{tpu_custom_call.1} parent=23 // pred_check_branch
          %178 = sbr.rel (%p176) target = $region28
        $region27: #{tpu_custom_call.1} parent=23 // pred_region
          %s179 = smul.u32 2, %s21
          %p180 = scmp.lt.s32.totalorder %s20, 1
          %s181 = scalar_select %p180, %s20, 1
          %p182 = scmp.lt.s32.totalorder %s179, 1
          %s183 = scalar_select %p182, %s179, 1
          %s184 = smul.addr %s181, 4
          %s185 = sadd.s32 %s183, %s184
          %s186 = smul.addr %s185, 8
          %s187 = scalar_lea.vmem %s0, %s186
          %s188 = smul.u32 2, %s21
        $region28: #{tpu_custom_call.1} parent=23 // pred_fallthru
          _
        // Predicated region
        $region29: #{tpu_custom_call.1} parent=23 // pred_check
          %p189 = pneg %p75
        $region30: #{tpu_custom_call.1} parent=23 // pred_check_branch
          %191 = sbr.rel (%p189) target = $region32
        $region31: #{tpu_custom_call.1} parent=23 // pred_region
          %s192 = smul.u32 2, %s21
          %p193 = scmp.lt.s32.totalorder %s20, 1
          %s194 = scalar_select %p193, %s20, 1
          %p195 = scmp.lt.s32.totalorder %s192, 1
          %s196 = scalar_select %p195, %s192, 1
          %s197 = smul.addr %s194, 4
          %s198 = sadd.s32 %s196, %s197
          %s199 = smul.addr %s198, 8
          %s200 = scalar_lea.vmem %s1, %s199
          %s201 = smul.u32 2, %s21
        $region32: #{tpu_custom_call.1} parent=23 // pred_fallthru
          _
      $region24: #{tpu_custom_call.1} parent=5 // pred_fallthru
        _
      %p202 = scmp.le.s32.totalorder 1, %s13
      %p203 = scmp.lt.s32.totalorder %s13, 3
      %p204 = pnand %p202, %p203
      %p205 = pneg %p204
      // Predicated region
      $region33: #{tpu_custom_call.1} parent=5 // pred_check
        _
      $region34: #{tpu_custom_call.1} parent=5 // pred_check_branch
        %207 = sbr.rel (%p204) target = $region36
      $region35: #{tpu_custom_call.1} parent=5 // pred_region
        %s208 = ssub.s32 %s13, 1
        %s209 = smul.u32 2, %s23
        %p210 = scmp.lt.s32.totalorder %s22, 1
        %s211 = scalar_select %p210, %s22, 1
        %p212 = scmp.lt.s32.totalorder %s209, 1
        %s213 = scalar_select %p212, %s209, 1
        %s214 = smul.addr %s211, 4
        %s215 = sadd.s32 %s213, %s214
        %s216 = smul.addr %s215, 8
        %s217 = scalar_lea.vmem %s0, %s216
        %p218 = pneg %p53
        %p219 = pneg %p50
        %s220 = smul.u32 2, %s23
        %p221 = scmp.lt.s32.totalorder %s22, 1
        %s222 = scalar_select %p221, %s22, 1
        %p223 = scmp.lt.s32.totalorder %s220, 1
        %s224 = scalar_select %p223, %s220, 1
        %s225 = smul.addr %s222, 4
        %s226 = sadd.s32 %s224, %s225
        %s227 = smul.addr %s226, 8
        %s228 = scalar_lea.vmem %s1, %s227
        %p229 = pneg %p81
        %p230 = pneg %p78
        %p231 = pneg %p102
        %p232 = pneg %p99
        %p233 = pneg %p123
        %p234 = pneg %p120
        %p235 = pneg %p151
        %p236 = pneg %p148
        %s237 = sand.u32 %s138, 1
        %s238 = scalar_lea.sflag [#allocation3], %s237
        %s239 = sand.u32 %s138, 1
        %s240 = smul.addr %s239, 128
        %s241 = scalar_lea.vmem [#allocation2], %s240
        %s242 = smul.u32 2, %s23
        %p243 = scmp.lt.s32.totalorder %s22, 1
        %s244 = scalar_select %p243, %s22, 1
        %p245 = scmp.lt.s32.totalorder %s242, 1
        %s246 = scalar_select %p245, %s242, 1
        %s247 = smul.addr %s244, 4
        %s248 = sadd.s32 %s246, %s247
        %s249 = smul.addr %s248, 8
        %s250 = scalar_lea.vmem %s0, %s249
        %s251 = smul.u32 2, %s23
        %s252 = smul.u32 2, %s23
        %p253 = scmp.lt.s32.totalorder %s22, 1
        %s254 = scalar_select %p253, %s22, 1
        %p255 = scmp.lt.s32.totalorder %s252, 1
        %s256 = scalar_select %p255, %s252, 1
        %s257 = smul.addr %s254, 4
        %s258 = sadd.s32 %s256, %s257
        %s259 = smul.addr %s258, 8
        %s260 = scalar_lea.vmem %s1, %s259
        %s261 = smul.u32 2, %s23
        %s262 = smul.u32 2, %s23
        %v263 = vld [vmem:[%s2] sm:$0xff]
        %v264 = vld [vmem:[%s2 + $0x8] sm:$0xff]
        %v265 = vld [vmem:[%s2 + $0x10] sm:$0xff]
        %v266 = vld [vmem:[%s2 + $0x18] sm:$0xff]
        %v267 = vld [vmem:[%s2 + $0x20] sm:$0xff]
        %v268 = vld [vmem:[%s2 + $0x28] sm:$0xff]
        %v269 = vld [vmem:[%s2 + $0x30] sm:$0xff]
        %v270 = vld [vmem:[%s2 + $0x38] sm:$0xff]
        %v271 = vld [vmem:[%s3] sm:$0xff]
        %v272 = vld [vmem:[%s3 + $0x8] sm:$0xff]
        %v273 = vld [vmem:[%s3 + $0x10] sm:$0xff]
        %v274 = vld [vmem:[%s3 + $0x18] sm:$0xff]
        %v275 = vld [vmem:[%s3 + $0x20] sm:$0xff]
        %v276 = vld [vmem:[%s3 + $0x28] sm:$0xff]
        %v277 = vld [vmem:[%s3 + $0x30] sm:$0xff]
        %v278 = vld [vmem:[%s3 + $0x38] sm:$0xff]
        %v279 = vld [vmem:[%s250] sm:$0xff]
        %v280 = vld [vmem:[%s250 + $0x8] sm:$0xff]
        %v281 = vld [vmem:[%s250 + $0x10] sm:$0xff]
        %v282 = vld [vmem:[%s250 + $0x18] sm:$0xff]
        %v283 = vld [vmem:[%s260] sm:$0xff]
        %v284 = vld [vmem:[%s260 + $0x8] sm:$0xff]
        %v285 = vld [vmem:[%s260 + $0x10] sm:$0xff]
        %v286 = vld [vmem:[%s260 + $0x18] sm:$0xff]
        %v287 = vadd.f32 %v279, %v283
        %v288 = vadd.f32 %v280, %v284
        %v289 = vadd.f32 %v281, %v285
        %v290 = vadd.f32 %v282, %v286
        %292 = vset.pattern.permute.xlu0 0
        %293 = vperm.xlu0 %292, %v271
        %v294 = vpop.permute.xlu0 %293
        %297 = vset.pattern.permute.xlu0 0
        %298 = vperm.xlu0 %297, %v272
        %v299 = vpop.permute.xlu0 %298
        %302 = vset.pattern.permute.xlu0 0
        %303 = vperm.xlu0 %302, %v273
        %v304 = vpop.permute.xlu0 %303
        %307 = vset.pattern.permute.xlu0 0
        %308 = vperm.xlu0 %307, %v274
        %v309 = vpop.permute.xlu0 %308
        %312 = vset.pattern.permute.xlu0 0
        %313 = vperm.xlu0 %312, %v275
        %v314 = vpop.permute.xlu0 %313
        %317 = vset.pattern.permute.xlu0 0
        %318 = vperm.xlu0 %317, %v276
        %v319 = vpop.permute.xlu0 %318
        %322 = vset.pattern.permute.xlu0 0
        %323 = vperm.xlu0 %322, %v277
        %v324 = vpop.permute.xlu0 %323
        %327 = vset.pattern.permute.xlu0 0
        %328 = vperm.xlu0 %327, %v278
        %v329 = vpop.permute.xlu0 %328
        %vm331 = vcmask 130048
        %v333 = vsel %vm331, %v263, 0
        %v336 = vsel %vm331, %v264, 0
        %v339 = vsel %vm331, %v265, 0
        %v342 = vsel %vm331, %v266, 0
        %v345 = vsel %vm331, %v267, 0
        %v348 = vsel %vm331, %v268, 0
        %v351 = vsel %vm331, %v269, 0
        %v354 = vsel %vm331, %v270, 0
        %356 = vmatpush.msra.mxu0 0.0
        %357 = vmatpush.msra.mxu0 0.0
        %358 = vmatpush.msra.mxu0 0.0
        %359 = vmatpush.msra.mxu0 0.0
        %360 = vmatpush.msra.mxu0 0.0
        %361 = vmatpush.msra.mxu0 0.0
        %362 = vmatpush.msra.mxu0 0.0
        %363 = vmatpush.msra.mxu0 0.0
        %364 = vmatpush.msra.mxu0 0.0
        %365 = vmatpush.msra.mxu0 0.0
        %366 = vmatpush.msra.mxu0 0.0
        %367 = vmatpush.msra.mxu0 0.0
        %368 = vmatpush.msra.mxu0 0.0
        %369 = vmatpush.msra.mxu0 0.0
        %370 = vmatpush.msra.mxu0 %v289
        %371 = vmatpush.msra.mxu0 %v287
        %372 = vmatmul.f32.gmra.mxu0 %v333
        %v373 = vpop.f32.mrf.mxu0
        %v374 = vadd.f32 %v294, %v373
        %375 = vmatmul.f32.gmra.mxu0 %v336
        %v376 = vpop.f32.mrf.mxu0
        %v377 = vadd.f32 %v299, %v376
        %378 = vmatmul.f32.gmra.mxu0 %v339
        %v379 = vpop.f32.mrf.mxu0
        %v380 = vadd.f32 %v304, %v379
        %381 = vmatmul.f32.gmra.mxu0 %v342
        %v382 = vpop.f32.mrf.mxu0
        %v383 = vadd.f32 %v309, %v382
        %384 = vmatmul.f32.gmra.mxu0 %v345
        %v385 = vpop.f32.mrf.mxu0
        %v386 = vadd.f32 %v314, %v385
        %387 = vmatmul.f32.gmra.mxu0 %v348
        %v388 = vpop.f32.mrf.mxu0
        %v389 = vadd.f32 %v319, %v388
        %390 = vmatmul.f32.gmra.mxu0 %v351
        %v391 = vpop.f32.mrf.mxu0
        %v392 = vadd.f32 %v324, %v391
        %393 = vmatmul.f32.gmra.mxu0 %v354
        %v394 = vpop.f32.mrf.mxu0
        %v395 = vadd.f32 %v329, %v394
        %396 = vdwg.mxu0
        %397 = vmatpush.msra.mxu0 0.0
        %398 = vmatpush.msra.mxu0 0.0
        %399 = vmatpush.msra.mxu0 0.0
        %400 = vmatpush.msra.mxu0 0.0
        %401 = vmatpush.msra.mxu0 0.0
        %402 = vmatpush.msra.mxu0 0.0
        %403 = vmatpush.msra.mxu0 0.0
        %404 = vmatpush.msra.mxu0 0.0
        %405 = vmatpush.msra.mxu0 0.0
        %406 = vmatpush.msra.mxu0 0.0
        %407 = vmatpush.msra.mxu0 0.0
        %408 = vmatpush.msra.mxu0 0.0
        %409 = vmatpush.msra.mxu0 0.0
        %410 = vmatpush.msra.mxu0 0.0
        %411 = vmatpush.msra.mxu0 %v290
        %412 = vmatpush.msra.mxu0 %v288
        %413 = vmatmul.f32.gmra.mxu0 %v333
        %v414 = vpop.f32.mrf.mxu0
        %v415 = vadd.f32 %v294, %v414
        %416 = vmatmul.f32.gmra.mxu0 %v336
        %v417 = vpop.f32.mrf.mxu0
        %v418 = vadd.f32 %v299, %v417
        %419 = vmatmul.f32.gmra.mxu0 %v339
        %v420 = vpop.f32.mrf.mxu0
        %v421 = vadd.f32 %v304, %v420
        %422 = vmatmul.f32.gmra.mxu0 %v342
        %v423 = vpop.f32.mrf.mxu0
        %v424 = vadd.f32 %v309, %v423
        %425 = vmatmul.f32.gmra.mxu0 %v345
        %v426 = vpop.f32.mrf.mxu0
        %v427 = vadd.f32 %v314, %v426
        %428 = vmatmul.f32.gmra.mxu0 %v348
        %v429 = vpop.f32.mrf.mxu0
        %v430 = vadd.f32 %v319, %v429
        %431 = vmatmul.f32.gmra.mxu0 %v351
        %v432 = vpop.f32.mrf.mxu0
        %v433 = vadd.f32 %v324, %v432
        %434 = vmatmul.f32.gmra.mxu0 %v354
        %v435 = vpop.f32.mrf.mxu0
        %v436 = vadd.f32 %v329, %v435
        %437 = vdwg.mxu0
        %438 = vst [vmem:[%s241] sm:$0xff] %v374
        %439 = vst [vmem:[%s241 + $0x8] sm:$0xff] %v415
        %440 = vst [vmem:[%s241 + $0x10] sm:$0xff] %v377
        %441 = vst [vmem:[%s241 + $0x18] sm:$0xff] %v418
        %442 = vst [vmem:[%s241 + $0x20] sm:$0xff] %v380
        %443 = vst [vmem:[%s241 + $0x28] sm:$0xff] %v421
        %444 = vst [vmem:[%s241 + $0x30] sm:$0xff] %v383
        %445 = vst [vmem:[%s241 + $0x38] sm:$0xff] %v424
        %446 = vst [vmem:[%s241 + $0x40] sm:$0xff] %v386
        %447 = vst [vmem:[%s241 + $0x48] sm:$0xff] %v427
        %448 = vst [vmem:[%s241 + $0x50] sm:$0xff] %v389
        %449 = vst [vmem:[%s241 + $0x58] sm:$0xff] %v430
        %450 = vst [vmem:[%s241 + $0x60] sm:$0xff] %v392
        %451 = vst [vmem:[%s241 + $0x68] sm:$0xff] %v433
        %452 = vst [vmem:[%s241 + $0x70] sm:$0xff] %v395
        %453 = vst [vmem:[%s241 + $0x78] sm:$0xff] %v436
        %s454 = sand.u32 %s138, 1
        %s455 = scalar_lea.sflag [#allocation3], %s454
        %s456 = sand.u32 %s138, 1
        %s457 = smul.addr %s456, 128
        %s458 = scalar_lea.vmem [#allocation2], %s457
        // Predicated region
        $region37: #{tpu_custom_call.1} parent=35 // pred_check
          %p459 = pneg %p148
        $region38: #{tpu_custom_call.1} parent=35 // pred_check_branch
          %461 = sbr.rel (%p459) target = $region40
        $region39: #{tpu_custom_call.1} parent=35 // pred_region
          %s462 = smul.u32 2, %s23
          %464 = vsyncadd %s455, 0
          %s465 = smul.addr %s22, 16
          %s466 = sadd.s32 %s462, %s465
          %s467 = smul.addr %s466, 8
          %s468 = scalar_lea.hbm %s4, %s467
          %s469 = sshll.u32 %s458, 4
          %s470 = int_to_ptr.vmem [resolvable:$true] %s469
          %s471 = sshll.u32 %s468, 4
          %s472 = int_to_ptr.hbm [resolvable:$true] %s471
          %477 = dma.vmem_to_hbm [thread:$0]  %s470, 2048, %s472, %s455, 256, 256, 16
        $region40: #{tpu_custom_call.1} parent=35 // pred_fallthru
          _
      $region36: #{tpu_custom_call.1} parent=5 // pred_fallthru
        _
      %p478 = scmp.le.s32.totalorder 2, %s13
      // Predicated region
      $region41: #{tpu_custom_call.1} parent=5 // pred_check
        %p479 = pneg %p478
      $region42: #{tpu_custom_call.1} parent=5 // pred_check_branch
        %481 = sbr.rel (%p479) target = $region44
      $region43: #{tpu_custom_call.1} parent=5 // pred_region
        %s482 = ssub.s32 %s13, 2
        // Predicated region
        $region45: #{tpu_custom_call.1} parent=43 // pred_check
          %p483 = pneg %p154
        $region46: #{tpu_custom_call.1} parent=43 // pred_check_branch
          %485 = sbr.rel (%p483) target = $region48
        $region47: #{tpu_custom_call.1} parent=43 // pred_region
          %s486 = sand.u32 %s139, 1
          %s487 = scalar_lea.sflag [#allocation3], %s486
          %s488 = sand.u32 %s139, 1
          %s489 = smul.addr %s488, 128
          %s490 = scalar_lea.vmem [#allocation2], %s489
          %492 = dma.done %s487, 2048
        $region48: #{tpu_custom_call.1} parent=43 // pred_fallthru
          _
      $region44: #{tpu_custom_call.1} parent=5 // pred_fallthru
        _
    $region6: #{tpu_custom_call.1} parent=1 // loop_footer
      %s17 = sadd.s32 1, %s13
    $region7: #{tpu_custom_call.1} parent=1 // loop_footer_branch
      %12 = sbr.rel target = $region3
    $region8: #{tpu_custom_call.1} parent=1 // loop_exit
      _
    %493 = vsyncpa [#allocation3], 1
    %s494 = scalar_lea.sflag [#allocation3], 1
    %495 = vsyncpa %s494, 1

</llo_original>
